<compile_context>
chip_gen: v5e
topology: v5e:2x2
jax: 0.10.0
libtpu: 0.0.40
codegen_flags: <defaults>
</compile_context>

<pallas_src>
import functools
import math

import jax
import jax.numpy as jnp
from jax.experimental import pallas as pl
from jax.experimental.pallas import tpu as pltpu


def _round_up(v, m):
    return (v + m - 1) // m * m


def _vmem_cap_bytes():
    """~80% of this generation's physical VMEM (v5e/v6e: 128 MiB, v7x: 64 MiB)."""
    try:
        phys = pltpu.get_tpu_info().vmem_capacity_bytes
    except Exception:
        phys = 64 * 2**20  # conservative (v7x-sized) fallback
    return int(phys * 0.8)


# ---------------------------------------------------------------------------
# Kernel A: support = x @ W   (negligible flops; tiled over node rows only)
# ---------------------------------------------------------------------------
def _support_kernel(x_ref, w_ref, s_ref):
    s_ref[...] = jnp.dot(
        x_ref[...], w_ref[...], preferred_element_type=jnp.float32
    ).astype(s_ref.dtype)


# ---------------------------------------------------------------------------
# Kernel B: out = adj @ support (+ bias)
# grid = (row tiles "parallel", reduction tiles "arbitrary"); the output block
# stays resident across k.  Bias is folded into the accumulator init at k == 0.
# adj tiles are cast to the compute dtype *inside* the kernel (hidden under the
# HBM-bound adj DMA), so no host-side pad+cast pre-pass over the N^2 adjacency.
# ---------------------------------------------------------------------------
def _spmm_kernel(*refs, tk, has_bias, support_resident, use_scratch):
    it = iter(refs)
    adj_ref = next(it)
    s_ref = next(it)
    b_ref = next(it) if has_bias else None
    o_ref = next(it)
    # f32 output: accumulate directly into the resident output block.
    acc_ref = next(it) if use_scratch else o_ref

    k = pl.program_id(1)

    @pl.when(k == 0)
    def _():
        if has_bias:
            acc_ref[...] = jnp.broadcast_to(
                b_ref[...], acc_ref.shape
            ).astype(acc_ref.dtype)
        else:
            acc_ref[...] = jnp.zeros_like(acc_ref)

    if support_resident:
        # Whole support is VMEM-resident; slice out this reduction panel.
        off = pl.multiple_of(k * tk, 128)
        s = s_ref[pl.ds(off, tk), :]
    else:
        s = s_ref[...]

    adj = adj_ref[...]
    if adj.dtype != s.dtype:
        adj = adj.astype(s.dtype)  # in-kernel cast, hidden under the adj DMA

    acc_ref[...] += jnp.dot(adj, s, preferred_element_type=jnp.float32)

    if use_scratch:
        @pl.when(k == pl.num_programs(1) - 1)
        def _():
            o_ref[...] = acc_ref[...].astype(o_ref.dtype)


def graph_convolution(x, adj, weight, bias=None, *, tm=512, tk=2048,
                      compute_dtype=None, support_resident=None):
    """GCN layer forward: adj @ (x @ weight) [+ bias].

    x      : (N, F_in)
    adj    : (N, N) dense adjacency
    weight : (F_in, F_out)
    bias   : (F_out,) or None
    compute_dtype : None -> x.dtype (default, matches the torch f32 reference);
                    jnp.bfloat16 opts into bf16 MXU operands (f32 accumulate).
    returns: (N, F_out) in x.dtype
    """
    n, f_in = x.shape
    f_out = weight.shape[1]
    assert adj.shape == (n, n)
    assert weight.shape[0] == f_in
    out_dtype = x.dtype
    compute_dtype = jnp.dtype(x.dtype if compute_dtype is None else compute_dtype)
    cd_bytes = compute_dtype.itemsize
    adj_itemsize = jnp.dtype(adj.dtype).itemsize
    out_itemsize = jnp.dtype(out_dtype).itemsize

    # Lane-dense output features (unmasked vst on the dominant output stream).
    f_out_p = _round_up(f_out, 128)

    # ---- tile selection ----------------------------------------------------
    n_128 = _round_up(n, 128)
    tm = min(_round_up(tm, 128), n_128)
    # Keep >= 2 row tiles when the graph allows, so both v7x TensorCores get
    # work on the "parallel" row axis (cheap no-op on v5e/v6e).
    if n_128 // tm < 2 and n_128 >= 256:
        tm = max(128, (n_128 // 2) // 128 * 128)
    tk = min(_round_up(tk, 128), n_128)
    tk = max(tm, (tk // tm) * tm)  # tk a multiple of tm (so tm | n_kp)

    n_rp = _round_up(n, tm)   # adj rows / output rows
    n_kp = _round_up(n, tk)   # adj cols / support rows

    # ---- pad / cast the small operands (guarded; adj keeps its dtype) ------
    x_p = x if n_kp == n else jnp.pad(x, ((0, n_kp - n), (0, 0)))
    if x_p.dtype != compute_dtype:
        x_p = x_p.astype(compute_dtype)
    w_p = weight if f_out_p == f_out else jnp.pad(
        weight, ((0, 0), (0, f_out_p - f_out)))
    if w_p.dtype != compute_dtype:
        w_p = w_p.astype(compute_dtype)
    # adj: pad only if misaligned; NO dtype cast (cast happens in-kernel).
    adj_p = adj if (n_rp == n and n_kp == n) else jnp.pad(
        adj, ((0, n_rp - n), (0, n_kp - n)))

    has_bias = bias is not None
    if has_bias:
        b = bias.astype(jnp.float32).reshape(1, f_out)
        bias_p = b if f_out_p == f_out else jnp.pad(
            b, ((0, 0), (0, f_out_p - f_out)))

    # ---- VMEM budget & support-residency decision ---------------------------
    cap = _vmem_cap_bytes()
    use_scratch = jnp.dtype(out_dtype) != jnp.dtype(jnp.float32)
    base_est = (2 * tm * tk * adj_itemsize            # adj tiles (double-buffered)
                + 2 * tm * f_out_p * out_itemsize     # output tiles
                + (tm * f_out_p * 4 if use_scratch else 0)
                + (2 * f_out_p * 4 if has_bias else 0)
                + (1 << 20))                          # slack
    resident_bytes = 2 * n_kp * f_out_p * cd_bytes    # whole support (2 bufs)
    stream_bytes = 2 * tk * f_out_p * cd_bytes
    if support_resident is None:
        support_resident = (base_est + resident_bytes) <= int(0.6 * cap)
    sup_vmem = resident_bytes if support_resident else stream_bytes
    vmem_limit = int(min(max(2 * (base_est + sup_vmem), 32 * 2**20), cap))

    # ---- Kernel A: support = x @ W ------------------------------------------
    support = pl.pallas_call(
        _support_kernel,
        out_shape=jax.ShapeDtypeStruct((n_kp, f_out_p), compute_dtype),
        grid=(n_kp // tm,),
        in_specs=[
            pl.BlockSpec((tm, f_in), lambda i: (i, 0)),
            pl.BlockSpec((f_in, f_out_p), lambda i: (0, 0)),
        ],
        out_specs=pl.BlockSpec((tm, f_out_p), lambda i: (i, 0)),
        compiler_params=pltpu.CompilerParams(
            dimension_semantics=("parallel",)),
        cost_estimate=pl.CostEstimate(
            flops=2 * n_kp * f_in * f_out_p,
            transcendentals=0,
            bytes_accessed=(n_kp * f_in + f_in * f_out_p
                            + n_kp * f_out_p) * cd_bytes),
    )(x_p, w_p)

    # ---- Kernel B: out = adj @ support (+ bias) ------------------------------
    adj_spec = pl.BlockSpec((tm, tk), lambda i, k: (i, k))
    if support_resident:
        # Constant block index -> fetched once, VMEM-resident for the whole grid.
        s_spec = pl.BlockSpec((n_kp, f_out_p), lambda i, k: (0, 0))
    else:
        s_spec = pl.BlockSpec((tk, f_out_p), lambda i, k: (k, 0))
    o_spec = pl.BlockSpec((tm, f_out_p), lambda i, k: (i, 0))  # resident over k

    operands = [adj_p, support]
    in_specs = [adj_spec, s_spec]
    if has_bias:
        operands.append(bias_p)
        in_specs.append(pl.BlockSpec((1, f_out_p), lambda i, k: (0, 0)))

    kernel = functools.partial(
        _spmm_kernel, tk=tk, has_bias=has_bias,
        support_resident=support_resident, use_scratch=use_scratch)

    sup_reads = 1 if support_resident else (n_rp // tm)
    cost = pl.CostEstimate(
        flops=2 * n_rp * n_kp * f_out_p,
        transcendentals=0,
        bytes_accessed=(n_rp * n_kp * adj_itemsize
                        + sup_reads * n_kp * f_out_p * cd_bytes
                        + n_rp * f_out_p * out_itemsize
                        + (f_out_p * 4 if has_bias else 0)))

    out_p = pl.pallas_call(
        kernel,
        out_shape=jax.ShapeDtypeStruct((n_rp, f_out_p), out_dtype),
        grid=(n_rp // tm, n_kp // tk),
        in_specs=in_specs,
        out_specs=o_spec,
        scratch_shapes=([pltpu.VMEM((tm, f_out_p), jnp.float32)]
                        if use_scratch else []),
        compiler_params=pltpu.CompilerParams(
            dimension_semantics=("parallel", "arbitrary"),
            vmem_limit_bytes=vmem_limit),
        cost_estimate=cost,
    )(*operands)

    return out_p[:n, :f_out]


if __name__ == "__main__":
    key = jax.random.PRNGKey(0)
    k_x, k_adj, k_w, k_b, k_x2, k_adj2 = jax.random.split(key, 6)

    # ---- case 1: tiny graph, default f32 path with bias ---------------------
    N, F_IN, F_OUT = 8, 32, 16
    x = jax.random.normal(k_x, (N, F_IN), dtype=jnp.float32)

    # Symmetric row-normalized adjacency with self-loops (typical GCN input).
    a = (jax.random.uniform(k_adj, (N, N)) > 0.5).astype(jnp.float32)
    a = jnp.maximum(a, a.T) + jnp.eye(N, dtype=jnp.float32)
    adj = a / jnp.sum(a, axis=1, keepdims=True)

    # Parameter init mirroring reset_parameters(): uniform(-stdv, stdv).
    stdv = 1.0 / math.sqrt(F_OUT)
    weight = jax.random.uniform(
        k_w, (F_IN, F_OUT), minval=-stdv, maxval=stdv, dtype=jnp.float32)
    bias = jax.random.uniform(
        k_b, (F_OUT,), minval=-stdv, maxval=stdv, dtype=jnp.float32)

    ref = adj @ (x @ weight) + bias[None, :]
    out = jax.block_until_ready(graph_convolution(x, adj, weight, bias))
    assert out.shape == (N, F_OUT)
    assert jnp.allclose(out, ref, atol=1e-2, rtol=1e-2), "case 1 mismatch"

    # ---- case 2: misaligned N, forced streaming-support path, no bias -------
    N2 = 300
    x2 = jax.random.normal(k_x2, (N2, F_IN), dtype=jnp.float32)
    a2 = (jax.random.uniform(k_adj2, (N2, N2)) > 0.8).astype(jnp.float32)
    a2 = jnp.maximum(a2, a2.T) + jnp.eye(N2, dtype=jnp.float32)
    adj2 = a2 / jnp.sum(a2, axis=1, keepdims=True)

    ref2 = adj2 @ (x2 @ weight)
    out2 = jax.block_until_ready(
        graph_convolution(x2, adj2, weight, None, tm=128, tk=128,
                          support_resident=False))
    assert out2.shape == (N2, F_OUT)
    assert jnp.allclose(out2, ref2, atol=1e-2, rtol=1e-2), "case 2 mismatch"

    # ---- case 3: opt-in bf16 operands (in-kernel adj cast, f32 accumulate) --
    out3 = jax.block_until_ready(
        graph_convolution(x, adj, weight, bias, compute_dtype=jnp.bfloat16))
    assert jnp.allclose(out3, ref, atol=5e-2, rtol=5e-2), "case 3 mismatch"

    print("KERNEL_OK")
</pallas_src>

<mosaic_0001>
module attributes {stable_mosaic.version = 11 : i64} {
  func.func @_support_kernel(%arg0: i32, %arg1: memref<128x32xf32, #tpu.memory_space<vmem>>, %arg2: memref<32x128xf32, #tpu.memory_space<vmem>>, %arg3: memref<128x128xf32, #tpu.memory_space<vmem>>) attributes {dimension_semantics = [#tpu.dimension_semantics<parallel>], iteration_bounds = array<i64: 1>, scalar_prefetch = 0 : i64, scratch_operands = 0 : i64, tpu.core_type = #tpu.core_type<tc>, window_params = [{transform_indices = @transform_0, window_bounds = array<i64: 128, 32>}, {pipeline_mode = #tpu.pipeline_mode<synchronous>, transform_indices = @transform_1, window_bounds = array<i64: 32, 128>}, {transform_indices = @transform_2, window_bounds = array<i64: 128, 128>}]} {
    %c0 = arith.constant 0 : index
    %c0_0 = arith.constant 0 : index
    %0 = vector.load %arg1[%c0, %c0_0] : memref<128x32xf32, #tpu.memory_space<vmem>>, vector<128x32xf32>
    %c0_1 = arith.constant 0 : index
    %c0_2 = arith.constant 0 : index
    %1 = vector.load %arg2[%c0_1, %c0_2] : memref<32x128xf32, #tpu.memory_space<vmem>>, vector<32x128xf32>
    %cst = arith.constant dense<0.000000e+00> : vector<128x128xf32>
    %2 = tpu.matmul %0, %1, %cst {dimension_numbers = #tpu.dot_dimension_numbers<[1], [0], [0], [1], [0, 0, 1, 1], [], []>} : vector<128x32xf32>, vector<32x128xf32>, vector<128x128xf32> -> vector<128x128xf32>
    %c0_3 = arith.constant 0 : index
    %c0_4 = arith.constant 0 : index
    %3 = vector.load %arg3[%c0_3, %c0_4] : memref<128x128xf32, #tpu.memory_space<vmem>>, vector<128x128xf32>
    tpu.vector_store %arg3[%c0_3, %c0_4], %2 {strides = array<i32>} : memref<128x128xf32, #tpu.memory_space<vmem>>, vector<128x128xf32>,
    return
  }
  func.func @transform_0(%arg0: i32) -> (i32, i32) {
    %c0_i32 = arith.constant 0 : i32
    %c0_i32_0 = arith.constant 0 : i32
    return %arg0, %c0_i32 : i32, i32
  }
  func.func @transform_1(%arg0: i32) -> (i32, i32) {
    %c0_i32 = arith.constant 0 : i32
    %c0_i32_0 = arith.constant 0 : i32
    %c0_i32_1 = arith.constant 0 : i32
    return %c0_i32, %c0_i32_0 : i32, i32
  }
  func.func @transform_2(%arg0: i32) -> (i32, i32) {
    %c0_i32 = arith.constant 0 : i32
    %c0_i32_0 = arith.constant 0 : i32
    return %arg0, %c0_i32 : i32, i32
  }
}

</mosaic_0001>

<llo_original>
// kernel: tpu_custom_call.1
$region0: #{tpu_custom_call.1}
  #allocation0 [shape = 'u32[]', space=smem, size = 0x4, offset = 0x4, fixed_abs, tag = 'smem constant byte address 0x4 - core index']
  #allocation1 [shape = 'u32[72,128]{1,0:T(1,128)}', space=vmem, size = 0x9000, scoped, tag = 'internal scratch']
  %s0 = inlined_call_operand.vmem [shape: f32[128,32], index: 0, kind: input, shape index: {}]
  %s1 = inlined_call_operand.vmem [shape: f32[32,128], index: 1, kind: input, shape index: {}]
  %s2 = inlined_call_operand.hbm [shape: f32[128,128], index: 2, kind: output, shape index: {}]
  %s3 = sld [smem:[#allocation0]]
  $region18: #{tpu_custom_call.1} parent=0
    _
  %s5 = ssub.s32 1, %s3
  %s6 = scalar_select 0, %s5, %s3
  $region1: #{tpu_custom_call.1} parent=0
    #allocation2 [shape = 'u8[65536]{0}', space=vmem, size = 0x10000, scoped, tag = 'output window, operand 0, single buffered']
    #allocation3 [shape = 's32[1]{0}', space=sflag, size = 0x4, scoped, tag = 'scoped memory for tpu_custom_call.1']
    %7 = vsyncpa [#allocation3], 0
    // Predicated region
    $region2: #{tpu_custom_call.1} parent=1 // pred_check
      _
    $region3: #{tpu_custom_call.1} parent=1 // pred_check_branch
      %9 = sbr.rel (0) target = $region5
    $region4: #{tpu_custom_call.1} parent=1 // pred_region
      _
    $region5: #{tpu_custom_call.1} parent=1 // pred_fallthru
      _
    // Predicated region
    $region6: #{tpu_custom_call.1} parent=1 // pred_check
      _
    $region7: #{tpu_custom_call.1} parent=1 // pred_check_branch
      %11 = sbr.rel (0) target = $region9
    $region8: #{tpu_custom_call.1} parent=1 // pred_region
      _
    $region9: #{tpu_custom_call.1} parent=1 // pred_fallthru
      _
    %v12 = vld [vmem:[%s0] sm:$0xff]
    %v13 = vld [vmem:[%s0 + $0x8] sm:$0xff]
    %v14 = vld [vmem:[%s0 + $0x10] sm:$0xff]
    %v15 = vld [vmem:[%s0 + $0x18] sm:$0xff]
    %v16 = vld [vmem:[%s0 + $0x20] sm:$0xff]
    %v17 = vld [vmem:[%s0 + $0x28] sm:$0xff]
    %v18 = vld [vmem:[%s0 + $0x30] sm:$0xff]
    %v19 = vld [vmem:[%s0 + $0x38] sm:$0xff]
    %v20 = vld [vmem:[%s0 + $0x40] sm:$0xff]
    %v21 = vld [vmem:[%s0 + $0x48] sm:$0xff]
    %v22 = vld [vmem:[%s0 + $0x50] sm:$0xff]
    %v23 = vld [vmem:[%s0 + $0x58] sm:$0xff]
    %v24 = vld [vmem:[%s0 + $0x60] sm:$0xff]
    %v25 = vld [vmem:[%s0 + $0x68] sm:$0xff]
    %v26 = vld [vmem:[%s0 + $0x70] sm:$0xff]
    %v27 = vld [vmem:[%s0 + $0x78] sm:$0xff]
    %v28 = vld [vmem:[%s1] sm:$0xff]
    %v29 = vld [vmem:[%s1 + $0x8] sm:$0xff]
    %v30 = vld [vmem:[%s1 + $0x10] sm:$0xff]
    %v31 = vld [vmem:[%s1 + $0x18] sm:$0xff]
    %vm32 = vcmask 261120
    %v34 = vsel %vm32, %v12, 0
    %v37 = vsel %vm32, %v13, 0
    %v40 = vsel %vm32, %v14, 0
    %v43 = vsel %vm32, %v15, 0
    %v46 = vsel %vm32, %v16, 0
    %v49 = vsel %vm32, %v17, 0
    %v52 = vsel %vm32, %v18, 0
    %v55 = vsel %vm32, %v19, 0
    %v58 = vsel %vm32, %v20, 0
    %v61 = vsel %vm32, %v21, 0
    %v64 = vsel %vm32, %v22, 0
    %v67 = vsel %vm32, %v23, 0
    %v70 = vsel %vm32, %v24, 0
    %v73 = vsel %vm32, %v25, 0
    %v76 = vsel %vm32, %v26, 0
    %v79 = vsel %vm32, %v27, 0
    %81 = vmatpush.msra.mxu0 0.0
    %82 = vmatpush.msra.mxu0 0.0
    %83 = vmatpush.msra.mxu0 0.0
    %84 = vmatpush.msra.mxu0 0.0
    %85 = vmatpush.msra.mxu0 0.0
    %86 = vmatpush.msra.mxu0 0.0
    %87 = vmatpush.msra.mxu0 0.0
    %88 = vmatpush.msra.mxu0 0.0
    %89 = vmatpush.msra.mxu0 0.0
    %90 = vmatpush.msra.mxu0 0.0
    %91 = vmatpush.msra.mxu0 0.0
    %92 = vmatpush.msra.mxu0 0.0
    %93 = vmatpush.msra.mxu0 %v31
    %94 = vmatpush.msra.mxu0 %v30
    %95 = vmatpush.msra.mxu0 %v29
    %96 = vmatpush.msra.mxu0 %v28
    %97 = vmatmul.f32.gmra.mxu0 %v34
    %v98 = vpop.f32.mrf.mxu0
    %v99 = vadd.f32 0.0, %v98
    %100 = vmatmul.f32.gmra.mxu0 %v37
    %v101 = vpop.f32.mrf.mxu0
    %v102 = vadd.f32 0.0, %v101
    %103 = vmatmul.f32.gmra.mxu0 %v40
    %v104 = vpop.f32.mrf.mxu0
    %v105 = vadd.f32 0.0, %v104
    %106 = vmatmul.f32.gmra.mxu0 %v43
    %v107 = vpop.f32.mrf.mxu0
    %v108 = vadd.f32 0.0, %v107
    %109 = vmatmul.f32.gmra.mxu0 %v46
    %v110 = vpop.f32.mrf.mxu0
    %v111 = vadd.f32 0.0, %v110
    %112 = vmatmul.f32.gmra.mxu0 %v49
    %v113 = vpop.f32.mrf.mxu0
    %v114 = vadd.f32 0.0, %v113
    %115 = vmatmul.f32.gmra.mxu0 %v52
    %v116 = vpop.f32.mrf.mxu0
    %v117 = vadd.f32 0.0, %v116
    %118 = vmatmul.f32.gmra.mxu0 %v55
    %v119 = vpop.f32.mrf.mxu0
    %v120 = vadd.f32 0.0, %v119
    %121 = vmatmul.f32.gmra.mxu0 %v58
    %v122 = vpop.f32.mrf.mxu0
    %v123 = vadd.f32 0.0, %v122
    %124 = vmatmul.f32.gmra.mxu0 %v61
    %v125 = vpop.f32.mrf.mxu0
    %v126 = vadd.f32 0.0, %v125
    %127 = vmatmul.f32.gmra.mxu0 %v64
    %v128 = vpop.f32.mrf.mxu0
    %v129 = vadd.f32 0.0, %v128
    %130 = vmatmul.f32.gmra.mxu0 %v67
    %v131 = vpop.f32.mrf.mxu0
    %v132 = vadd.f32 0.0, %v131
    %133 = vmatmul.f32.gmra.mxu0 %v70
    %v134 = vpop.f32.mrf.mxu0
    %v135 = vadd.f32 0.0, %v134
    %136 = vmatmul.f32.gmra.mxu0 %v73
    %v137 = vpop.f32.mrf.mxu0
    %v138 = vadd.f32 0.0, %v137
    %139 = vmatmul.f32.gmra.mxu0 %v76
    %v140 = vpop.f32.mrf.mxu0
    %v141 = vadd.f32 0.0, %v140
    %142 = vmatmul.f32.gmra.mxu0 %v79
    %v143 = vpop.f32.mrf.mxu0
    %v144 = vadd.f32 0.0, %v143
    %145 = vdwg.mxu0
    %146 = vst [vmem:[#allocation2] sm:$0xff] %v99
    %147 = vst [vmem:[#allocation2 + $0x8] sm:$0xff] %v102
    %148 = vst [vmem:[#allocation2 + $0x10] sm:$0xff] %v105
    %149 = vst [vmem:[#allocation2 + $0x18] sm:$0xff] %v108
    %150 = vst [vmem:[#allocation2 + $0x20] sm:$0xff] %v111
    %151 = vst [vmem:[#allocation2 + $0x28] sm:$0xff] %v114
    %152 = vst [vmem:[#allocation2 + $0x30] sm:$0xff] %v117
    %153 = vst [vmem:[#allocation2 + $0x38] sm:$0xff] %v120
    %154 = vst [vmem:[#allocation2 + $0x40] sm:$0xff] %v123
    %155 = vst [vmem:[#allocation2 + $0x48] sm:$0xff] %v126
    %156 = vst [vmem:[#allocation2 + $0x50] sm:$0xff] %v129
    %157 = vst [vmem:[#allocation2 + $0x58] sm:$0xff] %v132
    %158 = vst [vmem:[#allocation2 + $0x60] sm:$0xff] %v135
    %159 = vst [vmem:[#allocation2 + $0x68] sm:$0xff] %v138
    %160 = vst [vmem:[#allocation2 + $0x70] sm:$0xff] %v141
    %161 = vst [vmem:[#allocation2 + $0x78] sm:$0xff] %v144
    // Predicated region
    $region10: #{tpu_custom_call.1} parent=1 // pred_check
      _
    $region11: #{tpu_custom_call.1} parent=1 // pred_check_branch
      %163 = sbr.rel (0) target = $region13
    $region12: #{tpu_custom_call.1} parent=1 // pred_region
      %165 = vsyncadd [#allocation3], 0
      %s166 = sshll.u32 [#allocation2], 4
      %s167 = int_to_ptr.vmem [resolvable:$true] %s166
      %s168 = sshll.u32 %s2, 4
      %s169 = int_to_ptr.hbm [resolvable:$true] %s168
      %174 = dma.vmem_to_hbm [thread:$0]  %s167, 2048, %s169, [#allocation3], 128, 128, 8
    $region13: #{tpu_custom_call.1} parent=1 // pred_fallthru
      _
    // Predicated region
    $region14: #{tpu_custom_call.1} parent=1 // pred_check
      _
    $region15: #{tpu_custom_call.1} parent=1 // pred_check_branch
      %176 = sbr.rel (0) target = $region17
    $region16: #{tpu_custom_call.1} parent=1 // pred_region
      %178 = dma.done [#allocation3], 2048
    $region17: #{tpu_custom_call.1} parent=1 // pred_fallthru
      _
    %179 = vsyncpa [#allocation3], 1

</llo_original>
